<compile_context>
chip_gen: v5e
topology: v5e:2x2
jax: 0.10.0
libtpu: 0.0.40
codegen_flags: <defaults>
</compile_context>

<pallas_src>
import math

import jax
import jax.numpy as jnp
from jax.experimental import pallas as pl
from jax.experimental.pallas import tpu as pltpu


def _round_up(x, m):
    return ((x + m - 1) // m) * m


def _vmem_budget():
    """(tile-selection budget, vmem_limit_bytes) from the device's VMEM size."""
    phys = 64 * 1024 * 1024               # conservative default (v7x per-TC VMEM)
    try:
        phys = int(getattr(pltpu.get_tpu_info(), "vmem_capacity_bytes", phys)) or phys
    except Exception:
        pass
    phys = max(32 * 1024 * 1024, min(phys, 128 * 1024 * 1024))
    budget = int(phys * 0.55)
    limit = min(phys - 8 * 1024 * 1024, budget + 16 * 1024 * 1024)
    return budget, limit


def _vmem_bytes(tm, tn, tk, in_bytes, out_bytes):
    """Rough per-step VMEM footprint (double-buffered blocks + scratch + temps)."""
    out_tiles = 2 * tm * tn * out_bytes       # double-buffered output block
    acc = tm * tn * 4                         # f32 accumulator scratch
    mm_tmp = tm * tn * 4                      # f32 dot-result temporary
    m1_tiles = 2 * tm * tk * in_bytes
    m2_tiles = 2 * tn * tk * in_bytes
    elementwise = tm * tk * (4 + in_bytes)    # f32 copy of m1 + folded operand
    return out_tiles + acc + mm_tmp + m1_tiles + m2_tiles + elementwise


def _choose_tiles(r1, r2, d, in_bytes, out_bytes, budget):
    tm_full = _round_up(r1, 8)
    tn_full = _round_up(r2, 128)
    # Full-D residency first.  Preference: lane-dense tN (amortizes step overhead
    # and output writeback), then large tM (divides the m2 HBM re-read factor).
    for tm_cap, tn_cap in ((512, 1024), (256, 1024), (256, 512),
                           (128, 512), (128, 256), (128, 128)):
        tm = min(tm_full, tm_cap)
        tn = min(tn_full, tn_cap)
        if _vmem_bytes(tm, tn, d, in_bytes, out_bytes) <= budget:
            return tm, tn, d
    # Huge D: tile the contraction dim (innermost "arbitrary" axis + accumulator).
    tm = min(tm_full, 256)
    tn = min(tn_full, 512)
    tk = 512
    while tk > 128 and _vmem_bytes(tm, tn, tk, in_bytes, out_bytes) > budget:
        tk //= 2
    return tm, tn, tk


def _make_kernel(n_k, op_dtype):
    def kernel(m1_ref, m2_ref, w_ref, bias_ref, out_ref, acc_scr, s1_scr):
        # m1_ref: (1, tM, tK)  m2_ref: (1, tN, tK)  w_ref: (8, tK)  bias_ref: (1,) SMEM
        # acc_scr: f32 K-accumulator (used when n_k > 1)  s1_scr: (tM, 1) f32
        j = pl.program_id(2)
        k = pl.program_id(3)

        m1 = m1_ref[0].astype(jnp.float32)            # elementwise math in f32
        w1 = w_ref[0:1, :]
        w2 = w_ref[1:2, :]
        w3 = w_ref[2:3, :]

        # Column term  sum_d m1*w1 + bias : accumulated over k during the j == 0
        # sweep only; reused for j > 0 (j, k are the trailing "arbitrary" axes,
        # so for a given (b, i) the j == 0 sweep runs first).
        @pl.when(j == 0)
        def _():
            part = jnp.sum(m1 * w1, axis=-1, keepdims=True)
            s1_scr[...] = jnp.where(k == 0, part + bias_ref[0],
                                    s1_scr[...] + part)

        # Fold the m2.w2 row term into the MXU operand:
        #   (m1*w3 + 1 (x) w2) @ m2^T = (m1*w3) @ m2^T + 1 (x) (m2.w2)
        a = (m1 * w3 + w2).astype(op_dtype)
        # NT-form matmul: contract the last (D-chunk) dim of both -- no m2.T.
        core = jax.lax.dot_general(
            a, m2_ref[0],
            dimension_numbers=(((1,), (1,)), ((), ())),
            preferred_element_type=jnp.float32)       # (tM, tN) f32

        if n_k == 1:
            out_ref[0] = (core + s1_scr[...]).astype(out_ref.dtype)
        else:
            @pl.when(k == 0)
            def _():
                acc_scr[...] = core

            @pl.when(k > 0)
            def _():
                acc_scr[...] = acc_scr[...] + core

            @pl.when(k == n_k - 1)
            def _():
                out_ref[0] = (acc_scr[...] + s1_scr[...]).astype(out_ref.dtype)

    return kernel


def matrix_attention(matrix_1, matrix_2, weight_vector, bias, *,
                     out_dtype=None, block_d=None):
    """matrix_1: (B,R1,D)  matrix_2: (B,R2,D)  weight_vector: (3*D,)  bias: (1,)

    out_dtype: output dtype (default: promoted input dtype).
    block_d:   optional contraction-tile override (multiple of 128); by default
               the full D extent stays resident unless VMEM forces K-tiling.
    """
    B, R1, D = matrix_1.shape
    B2, R2, D2 = matrix_2.shape
    assert B == B2 and D == D2

    op_dtype = jnp.promote_types(matrix_1.dtype, matrix_2.dtype)
    out_dtype = op_dtype if out_dtype is None else out_dtype
    m1 = matrix_1.astype(op_dtype)
    m2 = matrix_2.astype(op_dtype)
    in_bytes = jnp.dtype(op_dtype).itemsize
    out_bytes = jnp.dtype(out_dtype).itemsize

    budget, vmem_limit = _vmem_budget()
    tM, tN, tK = _choose_tiles(R1, R2, D, in_bytes, out_bytes, budget)
    if block_d is not None:
        tK = block_d

    # Megacore balance: keep at least two tiles on the "parallel" (b, i) axes.
    if B * pl.cdiv(R1, tM) < 2 and R1 > 8:
        tM = _round_up(pl.cdiv(R1, 2), 8)

    if tK >= D:                       # full-D residency, single K block
        tK, n_k, Dp = D, 1, D
    else:                             # K-tiled contraction
        tK = max(128, (tK // 128) * 128)
        n_k = pl.cdiv(D, tK)
        Dp = n_k * tK
        if Dp != D:                   # zero-pad D (inputs only; zeros contribute
            m1 = jnp.pad(m1, ((0, 0), (0, 0), (0, Dp - D)))   # nothing to the sum)
            m2 = jnp.pad(m2, ((0, 0), (0, 0), (0, Dp - D)))

    # Weights: rows 0..2 = w1, w2, w3; padded to 8 sublanes / Dp lanes.
    w = jnp.zeros((8, Dp), jnp.float32)
    w = w.at[:3, :D].set(weight_vector.reshape(3, D).astype(jnp.float32))
    bias_arr = bias.astype(jnp.float32).reshape(1)

    grid = (B, pl.cdiv(R1, tM), pl.cdiv(R2, tN), n_k)
    acc_shape = (tM, tN) if n_k > 1 else (8, 128)     # tiny placeholder when unused

    out = pl.pallas_call(
        _make_kernel(n_k, op_dtype),
        out_shape=jax.ShapeDtypeStruct((B, R1, R2), out_dtype),
        grid_spec=pltpu.PrefetchScalarGridSpec(
            num_scalar_prefetch=0,
            grid=grid,
            in_specs=[
                # m1 block index is constant over the trailing (j, k) axes when
                # n_k == 1, so it stays resident in VMEM across the whole j sweep.
                pl.BlockSpec((1, tM, tK), lambda b, i, j, k: (b, i, k)),
                pl.BlockSpec((1, tN, tK), lambda b, i, j, k: (b, j, k)),
                pl.BlockSpec((8, tK), lambda b, i, j, k: (0, k)),
                pl.BlockSpec(memory_space=pltpu.SMEM),
            ],
            out_specs=pl.BlockSpec((1, tM, tN), lambda b, i, j, k: (b, i, j)),
            scratch_shapes=[
                pltpu.VMEM(acc_shape, jnp.float32),   # K accumulator
                pltpu.VMEM((tM, 1), jnp.float32),     # s1 + bias column term
            ],
        ),
        compiler_params=pltpu.CompilerParams(
            dimension_semantics=("parallel", "parallel", "arbitrary", "arbitrary"),
            vmem_limit_bytes=vmem_limit,
        ),
    )(m1, m2, w, bias_arr)
    return out


def matrix_attention_ref(matrix_1, matrix_2, weight_vector, bias):
    """Plain-JAX reference mirroring the PyTorch forward."""
    D = matrix_1.shape[-1]
    w1, w2, w3 = weight_vector[:D], weight_vector[D:2 * D], weight_vector[2 * D:]
    t0 = jnp.einsum("brd,d->br", matrix_1, w1)[:, :, None]       # (B, R1, 1)
    t1 = jnp.einsum("brd,d->br", matrix_2, w2)[:, None, :]       # (B, 1, R2)
    t2 = jnp.einsum("bid,bjd->bij", matrix_1 * w3, matrix_2)     # (B, R1, R2)
    return t0 + t1 + t2 + bias


if __name__ == "__main__":
    key = jax.random.PRNGKey(0)
    k1, k2, kw, k3, k4, kw2 = jax.random.split(key, 6)

    # --- Test 1: module-sized shapes (full-D residency path, n_k == 1) ---
    B, R1, R2, D = 2, 8, 16, 32
    matrix_1 = jax.random.normal(k1, (B, R1, D), dtype=jnp.float32)
    matrix_2 = jax.random.normal(k2, (B, R2, D), dtype=jnp.float32)
    # Deterministic init matching reset_parameters(): U(-std, std), bias = 0.
    std = math.sqrt(6.0 / (D * 3 + 1))
    weight_vector = jax.random.uniform(
        kw, (3 * D,), dtype=jnp.float32, minval=-std, maxval=std)
    bias = jnp.zeros((1,), dtype=jnp.float32)

    out = jax.block_until_ready(matrix_attention(matrix_1, matrix_2, weight_vector, bias))
    ref = matrix_attention_ref(matrix_1, matrix_2, weight_vector, bias)
    assert out.shape == (B, R1, R2)
    assert jnp.allclose(out, ref, atol=1e-4, rtol=1e-4), "mismatch vs reference"

    # --- Test 2: exercise the K-tiled accumulator path + multi-j reuse + edge
    #     blocks (D=320 padded to 384 with tK=128 -> n_k=3; R2=1200 -> 2 j-tiles).
    Bb, R1b, R2b, Db = 2, 24, 1200, 320
    m1b = jax.random.normal(k3, (Bb, R1b, Db), dtype=jnp.float32)
    m2b = jax.random.normal(k4, (Bb, R2b, Db), dtype=jnp.float32)
    stdb = math.sqrt(6.0 / (Db * 3 + 1))
    wb = jax.random.uniform(kw2, (3 * Db,), dtype=jnp.float32, minval=-stdb, maxval=stdb)
    bb = jnp.full((1,), 0.5, dtype=jnp.float32)

    outb = jax.block_until_ready(matrix_attention(m1b, m2b, wb, bb, block_d=128))
    refb = matrix_attention_ref(m1b, m2b, wb, bb)
    assert outb.shape == (Bb, R1b, R2b)
    # Loose tolerance: kernel and XLA reference may use different MXU precision paths.
    rel_err = float(jnp.max(jnp.abs(outb - refb)) / (jnp.max(jnp.abs(refb)) + 1e-6))
    assert rel_err < 2e-2, f"K-tiled path mismatch: rel_err={rel_err}"

    print("KERNEL_OK")
</pallas_src>

<mosaic_0001>
module attributes {stable_mosaic.version = 11 : i64} {
  func.func @kernel(%arg0: i32, %arg1: i32, %arg2: i32, %arg3: i32, %arg4: memref<1x8x32xf32, #tpu.memory_space<vmem>>, %arg5: memref<1x128x32xf32, #tpu.memory_space<vmem>>, %arg6: memref<8x32xf32, #tpu.memory_space<vmem>>, %arg7: memref<1xf32, #tpu.memory_space<smem>>, %arg8: memref<1x8x128xf32, #tpu.memory_space<vmem>>, %arg9: memref<8x128xf32, #tpu.memory_space<vmem>>, %arg10: memref<8x1xf32, #tpu.memory_space<vmem>>) attributes {dimension_semantics = [#tpu.dimension_semantics<parallel>, #tpu.dimension_semantics<parallel>, #tpu.dimension_semantics<arbitrary>, #tpu.dimension_semantics<arbitrary>], iteration_bounds = array<i64: 2, 1, 1, 1>, scalar_prefetch = 0 : i64, scratch_operands = 2 : i64, tpu.core_type = #tpu.core_type<tc>, window_params = [{transform_indices = @transform_0, window_bounds = array<i64: 1, 8, 32>}, {transform_indices = @transform_1, window_bounds = array<i64: 1, 128, 32>}, {transform_indices = @transform_2, window_bounds = array<i64: 8, 32>}, {transform_indices = @transform_3, window_bounds = array<i64: 1>}, {transform_indices = @transform_4, window_bounds = array<i64: 1, 8, 128>}]} {
    %c0 = arith.constant 0 : index
    %c0_0 = arith.constant 0 : index
    %c0_1 = arith.constant 0 : index
    %0 = vector.load %arg4[%c0, %c0_0, %c0_1] : memref<1x8x32xf32, #tpu.memory_space<vmem>>, vector<1x8x32xf32>
    %1 = vector.shape_cast %0 : vector<1x8x32xf32> to vector<8x32xf32>
    %c0_2 = arith.constant 0 : index
    %c0_3 = arith.constant 0 : index
    %2 = vector.load %arg6[%c0_2, %c0_3] : memref<8x32xf32, #tpu.memory_space<vmem>>, vector<1x32xf32>
    %c1 = arith.constant 1 : index
    %c0_4 = arith.constant 0 : index
    %3 = vector.load %arg6[%c1, %c0_4] : memref<8x32xf32, #tpu.memory_space<vmem>>, vector<1x32xf32>
    %c2 = arith.constant 2 : index
    %c0_5 = arith.constant 0 : index
    %4 = vector.load %arg6[%c2, %c0_5] : memref<8x32xf32, #tpu.memory_space<vmem>>, vector<1x32xf32>
    %c0_i32 = arith.constant 0 : i32
    %5 = arith.cmpi eq, %arg2, %c0_i32 : i32
    %6 = arith.extui %5 : i1 to i32
    %c0_i32_6 = arith.constant 0 : i32
    %7 = arith.cmpi ne, %6, %c0_i32_6 : i32
    scf.if %7 {
      %21 = vector.broadcast %2 : vector<1x32xf32> to vector<8x32xf32>
      %22 = arith.mulf %1, %21 : vector<8x32xf32>
      %cst_15 = arith.constant dense<0.000000e+00> : vector<8xf32>
      %23 = vector.multi_reduction <add>, %22, %cst_15 [1] : vector<8x32xf32> to vector<8xf32>
      %24 = vector.shape_cast %23 : vector<8xf32> to vector<8x1xf32>
      %c0_i32_16 = arith.constant 0 : i32
      %25 = arith.cmpi eq, %arg3, %c0_i32_16 : i32
      %c0_17 = arith.constant 0 : index
      %26 = memref.load %arg7[%c0_17] : memref<1xf32, #tpu.memory_space<smem>>
      %27 = vector.broadcast %26 : f32 to vector<8x1xf32>
      %28 = arith.addf %24, %27 : vector<8x1xf32>
      %c0_18 = arith.constant 0 : index
      %c0_19 = arith.constant 0 : index
      %29 = vector.load %arg10[%c0_18, %c0_19] : memref<8x1xf32, #tpu.memory_space<vmem>>, vector<8x1xf32>
      %30 = arith.addf %29, %24 : vector<8x1xf32>
      %31 = arith.select %25, %28, %30 : vector<8x1xf32>
      %c0_20 = arith.constant 0 : index
      %c0_21 = arith.constant 0 : index
      %32 = vector.load %arg10[%c0_20, %c0_21] : memref<8x1xf32, #tpu.memory_space<vmem>>, vector<8x1xf32>
      tpu.vector_store %arg10[%c0_20, %c0_21], %31 {strides = array<i32>} : memref<8x1xf32, #tpu.memory_space<vmem>>, vector<8x1xf32>,
    } else {
    }
    %8 = vector.broadcast %4 : vector<1x32xf32> to vector<8x32xf32>
    %9 = arith.mulf %1, %8 : vector<8x32xf32>
    %10 = vector.broadcast %3 : vector<1x32xf32> to vector<8x32xf32>
    %11 = arith.addf %9, %10 : vector<8x32xf32>
    %c0_7 = arith.constant 0 : index
    %c0_8 = arith.constant 0 : index
    %c0_9 = arith.constant 0 : index
    %12 = vector.load %arg5[%c0_7, %c0_8, %c0_9] : memref<1x128x32xf32, #tpu.memory_space<vmem>>, vector<1x128x32xf32>
    %13 = vector.shape_cast %12 : vector<1x128x32xf32> to vector<128x32xf32>
    %cst = arith.constant dense<0.000000e+00> : vector<8x128xf32>
    %14 = tpu.matmul %11, %13, %cst {dimension_numbers = #tpu.dot_dimension_numbers<[1], [1], [0], [0], [0, 0, 1, 0], [], []>} : vector<8x32xf32>, vector<128x32xf32>, vector<8x128xf32> -> vector<8x128xf32>
    %c0_10 = arith.constant 0 : index
    %c0_11 = arith.constant 0 : index
    %15 = vector.load %arg10[%c0_10, %c0_11] : memref<8x1xf32, #tpu.memory_space<vmem>>, vector<8x1xf32>
    %16 = vector.broadcast %15 : vector<8x1xf32> to vector<8x128xf32>
    %17 = arith.addf %14, %16 : vector<8x128xf32>
    %c0_12 = arith.constant 0 : index
    %c0_13 = arith.constant 0 : index
    %c0_14 = arith.constant 0 : index
    %18 = vector.load %arg8[%c0_12, %c0_13, %c0_14] : memref<1x8x128xf32, #tpu.memory_space<vmem>>, vector<1x8x128xf32>
    %19 = vector.shape_cast %18 : vector<1x8x128xf32> to vector<8x128xf32>
    %20 = vector.shape_cast %17 : vector<8x128xf32> to vector<1x8x128xf32>
    tpu.vector_store %arg8[%c0_12, %c0_13, %c0_14], %20 {strides = array<i32>} : memref<1x8x128xf32, #tpu.memory_space<vmem>>, vector<1x8x128xf32>,
    return
  }
  func.func @transform_0(%arg0: i32, %arg1: i32, %arg2: i32, %arg3: i32) -> (i32, i32, i32) {
    %c0_i32 = arith.constant 0 : i32
    return %arg0, %arg1, %arg3 : i32, i32, i32
  }
  func.func @transform_1(%arg0: i32, %arg1: i32, %arg2: i32, %arg3: i32) -> (i32, i32, i32) {
    %c0_i32 = arith.constant 0 : i32
    return %arg0, %arg2, %arg3 : i32, i32, i32
  }
  func.func @transform_2(%arg0: i32, %arg1: i32, %arg2: i32, %arg3: i32) -> (i32, i32) {
    %c0_i32 = arith.constant 0 : i32
    %c0_i32_0 = arith.constant 0 : i32
    return %c0_i32, %arg3 : i32, i32
  }
  func.func @transform_3(%arg0: i32, %arg1: i32, %arg2: i32, %arg3: i32) -> i32 {
    %c0_i32 = arith.constant 0 : i32
    %c0_i32_0 = arith.constant 0 : i32
    return %c0_i32 : i32
  }
  func.func @transform_4(%arg0: i32, %arg1: i32, %arg2: i32, %arg3: i32) -> (i32, i32, i32) {
    %c0_i32 = arith.constant 0 : i32
    return %arg0, %arg1, %arg2 : i32, i32, i32
  }
}

</mosaic_0001>

<llo_original>
// kernel: tpu_custom_call.1
$region0: #{tpu_custom_call.1}
  #allocation0 [shape = 'u32[]', space=smem, size = 0x4, offset = 0x4, fixed_abs, tag = 'smem constant byte address 0x4 - core index']
  #allocation1 [shape = 'u32[72,128]{1,0:T(1,128)}', space=vmem, size = 0x9000, scoped, tag = 'internal scratch']
  #allocation2 [shape = 'f32[8,128]{1,0:T(8,128)}', space=vmem, size = 0x1000, scoped, tag = 'scratch operand']
  #allocation3 [shape = 'f32[8,1]{1,0:T(8,128)}', space=vmem, size = 0x1000, scoped, tag = 'scratch operand']
  #allocation4 [shape = 'f32[1]{0:T(128)S(6)}', space=smem, size = 0x200, scoped, tag = 'scoped memory for tpu_custom_call.1']
  %s0 = inlined_call_operand.hbm [shape: f32[2,8,32], index: 0, kind: input, shape index: {}]
  %s1 = inlined_call_operand.hbm [shape: f32[2,16,32], index: 1, kind: input, shape index: {}]
  %s2 = inlined_call_operand.hbm [shape: f32[8,32], index: 2, kind: input, shape index: {}]
  %s3 = inlined_call_operand.<no memory space> [shape: f32[1], index: 3, kind: input, shape index: {}]
  %s4 = inlined_call_operand.hbm [shape: f32[2,8,16], index: 4, kind: output, shape index: {}]
  %s5 = sld [smem:[#allocation0]]
  $region65: #{tpu_custom_call.1} parent=0
    _
  %s7 = ssub.s32 1, %s5
  %s8 = scalar_select 0, %s7, %s5
  %9 = sst [smem:[#allocation4]] %s3
  $region1: #{tpu_custom_call.1} parent=0
    #allocation5 [shape = 'u8[8192]{0}', space=vmem, size = 0x2000, scoped, tag = 'input window, operand 0']
    #allocation6 [shape = 's32[2]{0}', space=sflag, size = 0x8, scoped, tag = 'scoped memory for tpu_custom_call.1']
    #allocation7 [shape = 's32[2]{0}', space=sflag, size = 0x8, scoped, tag = 'scoped memory for tpu_custom_call.1']
    #allocation8 [shape = 'u8[131072]{0}', space=vmem, size = 0x20000, scoped, tag = 'input window, operand 1']
    #allocation9 [shape = 's32[2]{0}', space=sflag, size = 0x8, scoped, tag = 'scoped memory for tpu_custom_call.1']
    #allocation10 [shape = 'u8[4096]{0}', space=vmem, size = 0x1000, scoped, tag = 'input window, operand 2, single buffered']
    #allocation11 [shape = 'u8[8192]{0}', space=vmem, size = 0x2000, scoped, tag = 'output window, operand 0']
    %10 = vsyncpa [#allocation6], 0
    %s11 = scalar_lea.sflag [#allocation6], 1
    %12 = vsyncpa %s11, 0
    %13 = vsyncpa [#allocation9], 0
    %s14 = scalar_lea.sflag [#allocation9], 1
    %15 = vsyncpa %s14, 0
    %16 = vsyncpa [#allocation7], 0
    %s17 = scalar_lea.sflag [#allocation7], 1
    %18 = vsyncpa %s17, 0
    loop: start=0, step=1, limit=4
    $region2: #{tpu_custom_call.1} parent=1 // loop_pre_header
      _
    $region3: #{tpu_custom_call.1} parent=1 // loop_header
      %s20 = sphi 0, %s24
      %p21 = scmp.ge.s32.totalorder %s20, 4
      %s27 = sphi 0, %s53
      %s28 = sphi 0, %s49
      %s29 = sphi 0, %s45
      %s30 = sphi 0, %s41
      %s31 = sphi 0, %s27
      %s32 = sphi 0, %s28
      %s33 = sphi 0, %s29
      %s34 = sphi 0, %s30
      %s35 = sphi 0, %s31
      %s36 = sphi 0, %s32
      %s37 = sphi 0, %s33
      %s38 = sphi 0, %s34
      %s60 = sphi 0, %s62
      %s63 = sphi 0, %s60
      %s64 = sphi 0, %s63
      %s80 = sphi 0, %s64
      %s90 = sphi 0, %s92
      %s93 = sphi 0, %s90
      %s94 = sphi 0, %s93
      %s110 = sphi 0, %s94
      %s116 = sphi 0, %s118
      %s119 = sphi 0, %s116
      %s120 = sphi 0, %s119
      %s136 = sphi 0, %s120
      %s140 = sphi 0, %s140
      %s142 = sphi 0, %s140
      %s143 = sphi 0, %s142
      %s157 = sphi 0, %s143
      %s167 = sphi 0, %s169
      %s170 = sphi 0, %s167
      %s171 = sphi 0, %s170
      %s187 = sphi 0, %s171
    $region4: #{tpu_custom_call.1} parent=1 // loop_header_branch
      %23 = sbr.rel (%p21) target = $region8
    $region5: #{tpu_custom_call.1} parent=1 // loop_body
      %s25 = ssub.s32 %s20, 1
      %s26 = ssub.s32 %s20, 2
      %s39 = sadd.s32 1, %s30
      %p40 = scmp.ge.s32.totalorder %s39, 1
      %s41 = scalar_select %p40, 0, %s39
      %s42 = sadd.s32 1, %s29
      %s43 = scalar_select %p40, %s42, %s29
      %p44 = scmp.ge.s32.totalorder %s43, 1
      %s45 = scalar_select %p44, 0, %s43
      %s46 = sadd.s32 1, %s28
      %s47 = scalar_select %p44, %s46, %s28
      %p48 = scmp.ge.s32.totalorder %s47, 1
      %s49 = scalar_select %p48, 0, %s47
      %s50 = sadd.s32 1, %s27
      %s51 = scalar_select %p48, %s50, %s27
      %p52 = scmp.ge.s32.totalorder %s51, 2
      %s53 = scalar_select %p52, 0, %s51
      %s54 = ssub.s32 %s27, %s53
      %s55 = ssub.s32 %s28, %s49
      %s56 = sor.u32 %s54, %s55
      %s57 = ssub.s32 %s30, %s41
      %s58 = sor.u32 %s56, %s57
      %p59 = scmp.eq.s32.totalorder %s58, 0
      %s61 = sadd.s32 %s60, 1
      %s62 = scalar_select %p59, %s60, %s61
      %p65 = pneg %p59
      %p66 = scmp.eq.s32.totalorder %s20, 1
      %p67 = por %p65, %p66
      %p68 = scmp.ne.s32.totalorder %s60, %s63
      %p69 = scmp.eq.s32.totalorder %s20, 0
      %p70 = por %p68, %p69
      %p71 = scmp.ne.s32.totalorder %s60, %s63
      %p72 = scmp.eq.s32.totalorder %s25, 1
      %p73 = por %p71, %p72
      %p74 = scmp.ne.s32.totalorder %s63, %s64
      %p75 = scmp.eq.s32.totalorder %s25, 0
      %p76 = por %p74, %p75
      %p77 = scmp.ne.s32.totalorder %s63, %s64
      %p78 = scmp.eq.s32.totalorder %s26, 1
      %p79 = por %p77, %p78
      %p81 = scmp.ne.s32.totalorder %s64, %s80
      %p82 = scmp.eq.s32.totalorder %s26, 0
      %p83 = por %p81, %p82
      %s84 = ssub.s32 %s27, %s53
      %s85 = ssub.s32 %s29, %s45
      %s86 = sor.u32 %s84, %s85
      %s87 = ssub.s32 %s30, %s41
      %s88 = sor.u32 %s86, %s87
      %p89 = scmp.eq.s32.totalorder %s88, 0
      %s91 = sadd.s32 %s90, 1
      %s92 = scalar_select %p89, %s90, %s91
      %p95 = pneg %p89
      %p96 = scmp.eq.s32.totalorder %s20, 1
      %p97 = por %p95, %p96
      %p98 = scmp.ne.s32.totalorder %s90, %s93
      %p99 = scmp.eq.s32.totalorder %s20, 0
      %p100 = por %p98, %p99
      %p101 = scmp.ne.s32.totalorder %s90, %s93
      %p102 = scmp.eq.s32.totalorder %s25, 1
      %p103 = por %p101, %p102
      %p104 = scmp.ne.s32.totalorder %s93, %s94
      %p105 = scmp.eq.s32.totalorder %s25, 0
      %p106 = por %p104, %p105
      %p107 = scmp.ne.s32.totalorder %s93, %s94
      %p108 = scmp.eq.s32.totalorder %s26, 1
      %p109 = por %p107, %p108
      %p111 = scmp.ne.s32.totalorder %s94, %s110
      %p112 = scmp.eq.s32.totalorder %s26, 0
      %p113 = por %p111, %p112
      %s114 = ssub.s32 %s30, %s41
      %p115 = scmp.eq.s32.totalorder %s114, 0
      %s117 = sadd.s32 %s116, 1
      %s118 = scalar_select %p115, %s116, %s117
      %p121 = pneg %p115
      %p122 = scmp.eq.s32.totalorder %s20, 1
      %p123 = por %p121, %p122
      %p124 = scmp.ne.s32.totalorder %s116, %s119
      %p125 = scmp.eq.s32.totalorder %s20, 0
      %p126 = por %p124, %p125
      %p127 = scmp.ne.s32.totalorder %s116, %s119
      %p128 = scmp.eq.s32.totalorder %s25, 1
      %p129 = por %p127, %p128
      %p130 = scmp.ne.s32.totalorder %s119, %s120
      %p131 = scmp.eq.s32.totalorder %s25, 0
      %p132 = por %p130, %p131
      %p133 = scmp.ne.s32.totalorder %s119, %s120
      %p134 = scmp.eq.s32.totalorder %s26, 1
      %p135 = por %p133, %p134
      %p137 = scmp.ne.s32.totalorder %s120, %s136
      %p138 = scmp.eq.s32.totalorder %s26, 0
      %p139 = por %p137, %p138
      %s141 = sadd.s32 %s140, 1
      %p144 = scmp.eq.s32.totalorder %s20, 1
      %p145 = scmp.ne.s32.totalorder %s140, %s142
      %p146 = scmp.eq.s32.totalorder %s20, 0
      %p147 = por %p145, %p146
      %p148 = scmp.ne.s32.totalorder %s140, %s142
      %p149 = scmp.eq.s32.totalorder %s25, 1
      %p150 = por %p148, %p149
      %p151 = scmp.ne.s32.totalorder %s142, %s143
      %p152 = scmp.eq.s32.totalorder %s25, 0
      %p153 = por %p151, %p152
      %p154 = scmp.ne.s32.totalorder %s142, %s143
      %p155 = scmp.eq.s32.totalorder %s26, 1
      %p156 = por %p154, %p155
      %p158 = scmp.ne.s32.totalorder %s143, %s157
      %p159 = scmp.eq.s32.totalorder %s26, 0
      %p160 = por %p158, %p159
      %s161 = ssub.s32 %s27, %s53
      %s162 = ssub.s32 %s28, %s49
      %s163 = sor.u32 %s161, %s162
      %s164 = ssub.s32 %s29, %s45
      %s165 = sor.u32 %s163, %s164
      %p166 = scmp.eq.s32.totalorder %s165, 0
      %s168 = sadd.s32 %s167, 1
      %s169 = scalar_select %p166, %s167, %s168
      %p172 = pneg %p166
      %p173 = scmp.eq.s32.totalorder %s20, 1
      %p174 = por %p172, %p173
      %p175 = scmp.ne.s32.totalorder %s167, %s170
      %p176 = scmp.eq.s32.totalorder %s20, 0
      %p177 = por %p175, %p176
      %p178 = scmp.ne.s32.totalorder %s167, %s170
      %p179 = scmp.eq.s32.totalorder %s25, 1
      %p180 = por %p178, %p179
      %p181 = scmp.ne.s32.totalorder %s170, %s171
      %p182 = scmp.eq.s32.totalorder %s25, 0
      %p183 = por %p181, %p182
      %p184 = scmp.ne.s32.totalorder %s170, %s171
      %p185 = scmp.eq.s32.totalorder %s26, 1
      %p186 = por %p184, %p185
      %p188 = scmp.ne.s32.totalorder %s171, %s187
      %p189 = scmp.eq.s32.totalorder %s26, 0
      %p190 = por %p188, %p189
      %p191 = scmp.le.s32.totalorder 1, %s20
      %p192 = scmp.lt.s32.totalorder %s20, 3
      %p193 = pnand %p191, %p192
      %p194 = pneg %p193
      // Predicated region
      $region9: #{tpu_custom_call.1} parent=5 // pred_check
        _
      $region10: #{tpu_custom_call.1} parent=5 // pred_check_branch
        %196 = sbr.rel (%p193) target = $region12
      $region11: #{tpu_custom_call.1} parent=5 // pred_region
        %s197 = ssub.s32 %s20, 1
        // Predicated region
        $region13: #{tpu_custom_call.1} parent=11 // pred_check
          %p198 = pneg %p132
        $region14: #{tpu_custom_call.1} parent=11 // pred_check_branch
          %200 = sbr.rel (%p198) target = $region16
        $region15: #{tpu_custom_call.1} parent=11 // pred_region
          %202 = vsyncadd [#allocation9], 0
          %s203 = smul.addr %s34, 8
          %s204 = scalar_lea.hbm %s2, %s203
          %s206 = sshll.u32 %s204, 4
          %s207 = int_to_ptr.hbm [resolvable:$true] %s206
          %s208 = sshll.u32 [#allocation10], 4
          %s209 = int_to_ptr.vmem [resolvable:$true] %s208
          %211 = dma.hbm_to_vmem [thread:$0]  %s207, 128, %s209, [#allocation9]
        $region16: #{tpu_custom_call.1} parent=11 // pred_fallthru
          _
        // Predicated region
        $region17: #{tpu_custom_call.1} parent=11 // pred_check
          %p212 = pneg %p153
        $region18: #{tpu_custom_call.1} parent=11 // pred_check_branch
          %214 = sbr.rel (%p212) target = $region20
        $region19: #{tpu_custom_call.1} parent=11 // pred_region
          _
        $region20: #{tpu_custom_call.1} parent=11 // pred_fallthru
          _
      $region12: #{tpu_custom_call.1} parent=5 // pred_fallthru
        _
      %p215 = scmp.lt.s32.totalorder %s20, 2
      // Predicated region
      $region21: #{tpu_custom_call.1} parent=5 // pred_check
        %p216 = pneg %p215
      $region22: #{tpu_custom_call.1} parent=5 // pred_check_branch
        %218 = sbr.rel (%p216) target = $region24
      $region23: #{tpu_custom_call.1} parent=5 // pred_region
        // Predicated region
        $region25: #{tpu_custom_call.1} parent=23 // pred_check
          %p219 = pneg %p70
        $region26: #{tpu_custom_call.1} parent=23 // pred_check_branch
          %221 = sbr.rel (%p219) target = $region28
        $region27: #{tpu_custom_call.1} parent=23 // pred_region
          %s222 = sand.u32 %s60, 1
          %s223 = scalar_lea.sflag [#allocation6], %s222
          %s224 = sand.u32 %s60, 1
          %s225 = smul.addr %s224, 8
          %s226 = scalar_lea.vmem [#allocation5], %s225
          %228 = vsyncadd %s223, 0
          %s229 = sadd.s32 %s30, %s28
          %s230 = sadd.s32 %s229, %s27
          %s231 = smul.addr %s230, 8
          %s232 = scalar_lea.hbm %s0, %s231
          %s234 = sshll.u32 %s232, 4
          %s235 = int_to_ptr.hbm [resolvable:$true] %s234
          %s236 = sshll.u32 %s226, 4
          %s237 = int_to_ptr.vmem [resolvable:$true] %s236
          %239 = dma.hbm_to_vmem [thread:$0]  %s235, 128, %s237, %s223
        $region28: #{tpu_custom_call.1} parent=23 // pred_fallthru
          _
        // Predicated region
        $region29: #{tpu_custom_call.1} parent=23 // pred_check
          %p240 = pneg %p100
        $region30: #{tpu_custom_call.1} parent=23 // pred_check_branch
          %242 = sbr.rel (%p240) target = $region32
        $region31: #{tpu_custom_call.1} parent=23 // pred_region
          %s243 = sand.u32 %s20, 1
          %s244 = scalar_lea.sflag [#allocation9], %s243
          %s245 = sand.u32 %s90, 1
          %s246 = smul.addr %s245, 128
          %s247 = scalar_lea.vmem [#allocation8], %s246
          %s248 = smul.u32 16, %s29
          %s249 = ssub.s32 2, %s248
          %s250 = smul.u32 8, %s249
          %s251 = ssub.s32 128, %s250
          %s252 = sshll.u32 %s251, 4
          %253 = vsyncadd %s244, %s252
          %p254 = scmp.ne.s32.totalorder 0, %s250
          %s255 = sadd.s32 %s30, %s248
          %s256 = smul.addr %s27, 2
          %s257 = sadd.s32 %s255, %s256
          %s258 = smul.addr %s257, 8
          %s259 = scalar_lea.hbm %s1, %s258
          %s260 = smul.u32 8, %s249
          %s261 = sshll.u32 %s259, 4
          %s262 = int_to_ptr.hbm [resolvable:$true] %s261
          %s263 = sshll.u32 %s247, 4
          %s264 = int_to_ptr.vmem [resolvable:$true] %s263
          %s265 = sshll.u32 %s260, 4
          %269 = dma.hbm_to_vmem [thread:$0]  (%p254), %s262, %s265, %s264, %s244, 128, 128, 8
        $region32: #{tpu_custom_call.1} parent=23 // pred_fallthru
          _
      $region24: #{tpu_custom_call.1} parent=5 // pred_fallthru
        _
      %p270 = scmp.le.s32.totalorder 1, %s20
      %p271 = scmp.lt.s32.totalorder %s20, 3
      %p272 = pnand %p270, %p271
      %p273 = pneg %p272
      // Predicated region
      $region33: #{tpu_custom_call.1} parent=5 // pred_check
        _
      $region34: #{tpu_custom_call.1} parent=5 // pred_check_branch
        %275 = sbr.rel (%p272) target = $region36
      $region35: #{tpu_custom_call.1} parent=5 // pred_region
        %s276 = ssub.s32 %s20, 1
        %s277 = sand.u32 %s63, 1
        %s278 = scalar_lea.sflag [#allocation6], %s277
        %s279 = sand.u32 %s63, 1
        %s280 = smul.addr %s279, 8
        %s281 = scalar_lea.vmem [#allocation5], %s280
        // Predicated region
        $region37: #{tpu_custom_call.1} parent=35 // pred_check
          %p282 = pneg %p76
        $region38: #{tpu_custom_call.1} parent=35 // pred_check_branch
          %284 = sbr.rel (%p282) target = $region40
        $region39: #{tpu_custom_call.1} parent=35 // pred_region
          %286 = dma.done %s278, 128
        $region40: #{tpu_custom_call.1} parent=35 // pred_fallthru
          _
        %s287 = sand.u32 %s25, 1
        %s288 = scalar_lea.sflag [#allocation9], %s287
        %s289 = sand.u32 %s93, 1
        %s290 = smul.addr %s289, 128
        %s291 = scalar_lea.vmem [#allocation8], %s290
        // Predicated region
        $region41: #{tpu_custom_call.1} parent=35 // pred_check
          %p292 = pneg %p106
        $region42: #{tpu_custom_call.1} parent=35 // pred_check_branch
          %294 = sbr.rel (%p292) target = $region44
        $region43: #{tpu_custom_call.1} parent=35 // pred_region
          %296 = dma.done %s288, 2048
        $region44: #{tpu_custom_call.1} parent=35 // pred_fallthru
          _
        // Predicated region
        $region45: #{tpu_custom_call.1} parent=35 // pred_check
          %p297 = pneg %p132
        $region46: #{tpu_custom_call.1} parent=35 // pred_check_branch
          %299 = sbr.rel (%p297) target = $region48
        $region47: #{tpu_custom_call.1} parent=35 // pred_region
          %301 = dma.done [#allocation9], 128
        $region48: #{tpu_custom_call.1} parent=35 // pred_fallthru
          _
        %s302 = sand.u32 %s63, 1
        %s303 = scalar_lea.sflag [#allocation6], %s302
        %s304 = sand.u32 %s63, 1
        %s305 = smul.addr %s304, 8
        %s306 = scalar_lea.vmem [#allocation5], %s305
        %p307 = pneg %p76
        %p308 = pneg %p73
        %s309 = sand.u32 %s25, 1
        %s310 = scalar_lea.sflag [#allocation9], %s309
        %s311 = sand.u32 %s93, 1
        %s312 = smul.addr %s311, 128
        %s313 = scalar_lea.vmem [#allocation8], %s312
        %p314 = pneg %p106
        %p315 = pneg %p103
        %p316 = pneg %p132
        %p317 = pneg %p129
        %p318 = pneg %p153
        %p319 = pneg %p150
        %p320 = pneg %p183
        %p321 = pneg %p180
        %s322 = sand.u32 %s170, 1
        %s323 = scalar_lea.sflag [#allocation7], %s322
        %s324 = sand.u32 %s170, 1
        %s325 = smul.addr %s324, 8
        %s326 = scalar_lea.vmem [#allocation11], %s325
        %s327 = smul.u32 16, %s33
        %s328 = ssub.s32 2, %s327
        %s329 = smul.u32 8, %s328
        %v330 = vld [vmem:[%s281] sm:$0xff]
        %v331 = vld [vmem:[#allocation10] sm:$0x1]
        %v332 = vld [vmem:[#allocation10 + $0x1] sm:$0x1]
        %v333 = vld [vmem:[#allocation10 + $0x2] sm:$0x1]
        %p334 = scmp.eq.s32.totalorder %s33, 0
        // Predicated region
        $region49: #{tpu_custom_call.1} parent=35 // pred_check
          %p335 = pneg %p334
        $region50: #{tpu_custom_call.1} parent=35 // pred_check_branch
          %337 = sbr.rel (%p335) target = $region52
        $region51: #{tpu_custom_call.1} parent=35 // pred_region
          %v338 = vperm.slane %v331, 0
          %v339 = vmul.f32 %v330, %v338
          %vm340 = vcmask 261120
          %v341 = vsel %vm340, %v339, 0.0
          %342 = vadd.xlane.f32.xlu0 %v341
          %v343 = vpop.xlane.xlu0 %342
          %p344 = scmp.eq.s32.totalorder %s34, 0
          %s345 = sld [smem:[#allocation4]]
          %v346 = vstv %s345
          %v347 = vadd.f32 %v343, %v346
          %v348 = vld [vmem:[#allocation3] sm:$0xff]
          %v349 = vadd.f32 %v348, %v343
          %s350 = scalar_select %p344, 1, 0
          %v351 = vstv %s350
          %vm352 = vcmp.eq.s32.totalorder %v351, 1
          %v353 = vsel %vm352, %v347, %v349
          %vm354 = vcmask 7168
          %355 = vst.msk [vmem:[#allocation3] sm:$0xff] %vm354, %v353
        $region52: #{tpu_custom_call.1} parent=35 // pred_fallthru
          _
        %v356 = vperm.slane %v333, 0
        %v357 = vmul.f32 %v330, %v356
        %v358 = vperm.slane %v332, 0
        %v359 = vadd.f32 %v357, %v358
        %v360 = vld [vmem:[%s291] sm:$0xff]
        %v361 = vld [vmem:[%s291 + $0x8] sm:$0xff]
        %v362 = vld [vmem:[%s291 + $0x10] sm:$0xff]
        %v363 = vld [vmem:[%s291 + $0x18] sm:$0xff]
        %v364 = vld [vmem:[%s291 + $0x20] sm:$0xff]
        %v365 = vld [vmem:[%s291 + $0x28] sm:$0xff]
        %v366 = vld [vmem:[%s291 + $0x30] sm:$0xff]
        %v367 = vld [vmem:[%s291 + $0x38] sm:$0xff]
        %v368 = vld [vmem:[%s291 + $0x40] sm:$0xff]
        %v369 = vld [vmem:[%s291 + $0x48] sm:$0xff]
        %v370 = vld [vmem:[%s291 + $0x50] sm:$0xff]
        %v371 = vld [vmem:[%s291 + $0x58] sm:$0xff]
        %v372 = vld [vmem:[%s291 + $0x60] sm:$0xff]
        %v373 = vld [vmem:[%s291 + $0x68] sm:$0xff]
        %v374 = vld [vmem:[%s291 + $0x70] sm:$0xff]
        %v375 = vld [vmem:[%s291 + $0x78] sm:$0xff]
        %v376 = vld [vmem:[#allocation3] sm:$0xff]
        %378 = vset.pattern.permute.xlu0 0
        %379 = vperm.xlu0 %378, %v376
        %v380 = vpop.permute.xlu0 %379
        %vm382 = vcmask 261120
        %v384 = vsel %vm382, %v359, 0
        %v387 = vsel %vm382, %v360, 0
        %v390 = vsel %vm382, %v361, 0
        %v393 = vsel %vm382, %v362, 0
        %v396 = vsel %vm382, %v363, 0
        %v399 = vsel %vm382, %v364, 0
        %v402 = vsel %vm382, %v365, 0
        %v405 = vsel %vm382, %v366, 0
        %v408 = vsel %vm382, %v367, 0
        %v411 = vsel %vm382, %v368, 0
        %v414 = vsel %vm382, %v369, 0
        %v417 = vsel %vm382, %v370, 0
        %v420 = vsel %vm382, %v371, 0
        %v423 = vsel %vm382, %v372, 0
        %v426 = vsel %vm382, %v373, 0
        %v429 = vsel %vm382, %v374, 0
        %v432 = vsel %vm382, %v375, 0
        %434 = vmatpush.xpose.msra.mxu0 %v432
        %435 = vmatpush.xpose.msra.mxu0 %v429
        %436 = vmatpush.xpose.msra.mxu0 %v426
        %437 = vmatpush.xpose.msra.mxu0 %v423
        %438 = vmatpush.xpose.msra.mxu0 %v420
        %439 = vmatpush.xpose.msra.mxu0 %v417
        %440 = vmatpush.xpose.msra.mxu0 %v414
        %441 = vmatpush.xpose.msra.mxu0 %v411
        %442 = vmatpush.xpose.msra.mxu0 %v408
        %443 = vmatpush.xpose.msra.mxu0 %v405
        %444 = vmatpush.xpose.msra.mxu0 %v402
        %445 = vmatpush.xpose.msra.mxu0 %v399
        %446 = vmatpush.xpose.msra.mxu0 %v396
        %447 = vmatpush.xpose.msra.mxu0 %v393
        %448 = vmatpush.xpose.msra.mxu0 %v390
        %449 = vmatpush.xpose.msra.mxu0 %v387
        %450 = vmatmul.f32.gmra.mxu0 %v384
        %v451 = vpop.f32.mrf.mxu0
        %v452 = vadd.f32 %v380, %v451
        %453 = vdwg.mxu0
        %454 = vst [vmem:[%s326] sm:$0xff] %v452
        %s455 = sand.u32 %s170, 1
        %s456 = scalar_lea.sflag [#allocation7], %s455
        %s457 = sand.u32 %s170, 1
        %s458 = smul.addr %s457, 8
        %s459 = scalar_lea.vmem [#allocation11], %s458
        // Predicated region
        $region53: #{tpu_custom_call.1} parent=35 // pred_check
          %p460 = pneg %p180
        $region54: #{tpu_custom_call.1} parent=35 // pred_check_branch
          %462 = sbr.rel (%p460) target = $region56
        $region55: #{tpu_custom_call.1} parent=35 // pred_region
          %464 = vsyncadd %s456, 0
          %s465 = sadd.s32 %s33, %s32
          %s466 = sadd.s32 %s465, %s31
          %s467 = smul.addr %s466, 8
          %s468 = scalar_lea.hbm %s4, %s467
          %s470 = sshll.u32 %s459, 4
          %s471 = int_to_ptr.vmem [resolvable:$true] %s470
          %s472 = sshll.u32 %s468, 4
          %s473 = int_to_ptr.hbm [resolvable:$true] %s472
          %475 = dma.vmem_to_hbm [thread:$0]  %s471, 128, %s473, %s456
        $region56: #{tpu_custom_call.1} parent=35 // pred_fallthru
          _
      $region36: #{tpu_custom_call.1} parent=5 // pred_fallthru
        _
      %p476 = scmp.le.s32.totalorder 2, %s20
      // Predicated region
      $region57: #{tpu_custom_call.1} parent=5 // pred_check
        %p477 = pneg %p476
      $region58: #{tpu_custom_call.1} parent=5 // pred_check_branch
        %479 = sbr.rel (%p477) target = $region60
      $region59: #{tpu_custom_call.1} parent=5 // pred_region
        %s480 = ssub.s32 %s20, 2
        // Predicated region
        $region61: #{tpu_custom_call.1} parent=59 // pred_check
          %p481 = pneg %p186
        $region62: #{tpu_custom_call.1} parent=59 // pred_check_branch
          %483 = sbr.rel (%p481) target = $region64
        $region63: #{tpu_custom_call.1} parent=59 // pred_region
          %s484 = sand.u32 %s171, 1
          %s485 = scalar_lea.sflag [#allocation7], %s484
          %s486 = sand.u32 %s171, 1
          %s487 = smul.addr %s486, 8
          %s488 = scalar_lea.vmem [#allocation11], %s487
          %490 = dma.done %s485, 128
        $region64: #{tpu_custom_call.1} parent=59 // pred_fallthru
          _
      $region60: #{tpu_custom_call.1} parent=5 // pred_fallthru
        _
    $region6: #{tpu_custom_call.1} parent=1 // loop_footer
      %s24 = sadd.s32 1, %s20
    $region7: #{tpu_custom_call.1} parent=1 // loop_footer_branch
      %19 = sbr.rel target = $region3
    $region8: #{tpu_custom_call.1} parent=1 // loop_exit
      _
    %491 = vsyncpa [#allocation6], 1
    %s492 = scalar_lea.sflag [#allocation6], 1
    %493 = vsyncpa %s492, 1
    %494 = vsyncpa [#allocation9], 1
    %s495 = scalar_lea.sflag [#allocation9], 1
    %496 = vsyncpa %s495, 1
    %497 = vsyncpa [#allocation7], 1
    %s498 = scalar_lea.sflag [#allocation7], 1
    %499 = vsyncpa %s498, 1

</llo_original>
